<compile_context>
chip_gen: v7x
topology: tpu7x:2x2x1
jax: 0.10.0
libtpu: 0.0.40
codegen_flags: <defaults>
</compile_context>

<pallas_src>
import jax
import jax.numpy as jnp
from jax.experimental import pallas as pl
from jax.experimental.pallas import tpu as pltpu


def _round_up(x, m):
    return (x + m - 1) // m * m


def _make_fused_encoder_kernel(n_layers, n_pads):
    """Kernel for a fixed stack of Linear+Tanh layers.

    Ref layout: (x_ref, w_0, ..., w_{L-1}, bias_cat_ref, o_ref)
      w_l       : (K_l_pad, N_l_pad), fully VMEM-resident
      bias_cat  : (1, sum(N_l_pad)), f32, fully VMEM-resident
    """
    offsets = [0]
    for n in n_pads:
        offsets.append(offsets[-1] + n)

    def kernel(x_ref, *refs):
        o_ref = refs[-1]
        b_ref = refs[-2]
        h = x_ref[...]                                   # (tm, K_in)
        for l in range(n_layers):
            w = refs[l][...]                             # (K_l_pad, N_l_pad)
            b = b_ref[:, offsets[l]:offsets[l + 1]]      # (1, N_l_pad), f32
            # MXU matmul with f32 accumulate; bias-add + tanh in f32 (VPU/EUP).
            acc = jnp.dot(h.astype(w.dtype), w,
                          preferred_element_type=jnp.float32)
            h = jnp.tanh(acc + b)
        # Single lane-dense store of the (padded) final activation.
        o_ref[...] = h.astype(o_ref.dtype)

    return kernel


def encoder_forward(x, params, *, max_tm=None, use_bf16=None, interpret=False):
    """Fused Encoder forward: one pallas_call for the whole layer stack.

    x:       (M, input_size) float32
    params:  list of (w, b) with w: (K_l, N_l), b: (1, N_l) or (N_l,)
             (w already transposed vs. torch's (N, K) weight layout)
    returns: (M, code_size) float32
    """
    M, K_in = x.shape
    n_layers = len(params)
    assert n_layers >= 1
    out_dtype = x.dtype

    # ---- hardware-aware knobs ---------------------------------------------
    try:
        vmem_cap = int(pltpu.get_tpu_info().vmem_capacity_bytes)
    except Exception:
        vmem_cap = 64 << 20                  # conservative: v7x per-TC VMEM
    if max_tm is None:
        max_tm = 512 if vmem_cap >= (96 << 20) else 256   # v5e/v6e vs v7x

    # ---- precision: bf16 MXU path beyond toy scale -------------------------
    total_w = sum(int(w.size) for w, _ in params)
    if use_bf16 is None:
        use_bf16 = total_w >= (1 << 20)      # >= ~1M weight elems -> bf16
    compute_dtype = jnp.bfloat16 if use_bf16 else jnp.float32
    cdt = jnp.dtype(compute_dtype).itemsize

    # ---- batch tile: >= 2 grid steps when possible (v7x has 2 TCs) ---------
    min_splits = 2 if M >= 16 else 1
    tm = min(_round_up(pl.cdiv(M, min_splits), 8), _round_up(max_tm, 8))
    Mp = _round_up(M, tm)
    x_in = x.astype(compute_dtype)
    if Mp != M:
        x_in = jnp.pad(x_in, ((0, Mp - M), (0, 0)))

    # ---- pad every layer width to a multiple of 128 lanes ------------------
    # tanh(h @ [W|0] + [b|0]) = [tanh(hW+b) | 0]; the extra zero rows of the
    # next layer's weight see exactly those zero lanes, so the math is exact.
    n_pads = [_round_up(int(w.shape[1]), 128) for w, _ in params]
    padded_ws, padded_bs = [], []
    prev_k = K_in
    for l, (w, b) in enumerate(params):
        k, n = w.shape
        w = jnp.pad(w, ((0, prev_k - k), (0, n_pads[l] - n)))
        b = jnp.pad(b.reshape(1, -1), ((0, 0), (0, n_pads[l] - n)))
        padded_ws.append(w.astype(compute_dtype))
        padded_bs.append(b.astype(jnp.float32))
        prev_k = n_pads[l]
    bias_cat = jnp.concatenate(padded_bs, axis=1)     # (1, sum(N_l_pad)), f32
    code_size = int(params[-1][0].shape[1])
    n_out = n_pads[-1]

    # ---- BlockSpecs ---------------------------------------------------------
    # Weights/biases: whole-array VMEM residents (single copy, no pipelining).
    resident = pl.BlockSpec(memory_space=pltpu.MemorySpace.VMEM)
    in_specs = [pl.BlockSpec((tm, K_in), lambda i: (i, 0))]   # x tile (pipelined)
    in_specs += [resident] * n_layers                         # weights
    in_specs += [resident]                                    # concatenated biases
    out_spec = pl.BlockSpec((tm, n_out), lambda i: (i, 0))    # lane-dense store

    # ---- VMEM budget (incl. intermediate activations / f32 temporaries) ----
    buf_bytes = 2 * tm * K_in * cdt                           # x tile, 2x buffered
    buf_bytes += sum(int(w.size) for w in padded_ws) * cdt    # weights, 1 copy
    buf_bytes += int(bias_cat.size) * 4                       # biases,  1 copy
    buf_bytes += 2 * tm * n_out * jnp.dtype(out_dtype).itemsize  # out tile, 2x
    buf_bytes += 2 * tm * max(n_pads) * 4                     # h / matmul f32 temps
    vmem_limit = int(min(max(2 * buf_bytes, 16 << 20), int(0.8 * vmem_cap)))

    # ---- cost estimate for the XLA scheduler -------------------------------
    ks = [K_in] + n_pads[:-1]
    flops = 2 * Mp * sum(k * n for k, n in zip(ks, n_pads))
    transcendentals = Mp * sum(n_pads)
    bytes_accessed = (int(x_in.size) * cdt
                      + sum(int(w.size) for w in padded_ws) * cdt
                      + int(bias_cat.size) * 4
                      + Mp * n_out * jnp.dtype(out_dtype).itemsize)
    cost = pl.CostEstimate(flops=flops, transcendentals=transcendentals,
                           bytes_accessed=bytes_accessed)

    out_padded = pl.pallas_call(
        _make_fused_encoder_kernel(n_layers, n_pads),
        out_shape=jax.ShapeDtypeStruct((Mp, n_out), out_dtype),
        grid_spec=pltpu.PrefetchScalarGridSpec(
            num_scalar_prefetch=0,
            grid=(Mp // tm,),
            in_specs=in_specs,
            out_specs=out_spec,
        ),
        compiler_params=pltpu.CompilerParams(
            dimension_semantics=("parallel",),
            vmem_limit_bytes=vmem_limit,
        ),
        cost_estimate=cost,
        interpret=interpret,
    )(x_in, *padded_ws, bias_cat)

    # Slice off batch padding and lane padding outside the kernel.
    return out_padded[:M, :code_size]
    # TODO(synk): when the resident weight stack approaches ~0.5 * VMEM (v7x's
    # 64 MiB hits this at half the model size v5e/v6e tolerate), switch to a
    # per-layer tiled path: N (and K) grid axes marked "arbitrary", blocked
    # weight specs, and an f32 accumulator scratch instead of full residency.


def init_encoder_params(key, input_size, code_size, hidden_sizes=()):
    """Deterministic init mirroring nn.Linear's default U(-1/sqrt(fan_in), +)."""
    layer_sizes = list(hidden_sizes) + [code_size]
    params = []
    prev = input_size
    for out in layer_sizes:
        key, kw, kb = jax.random.split(key, 3)
        bound = 1.0 / jnp.sqrt(jnp.float32(prev))
        w = jax.random.uniform(kw, (prev, out), jnp.float32, -bound, bound)
        b = jax.random.uniform(kb, (1, out), jnp.float32, -bound, bound)
        params.append((w, b))
        prev = out
    return params


def encoder_forward_ref(x, params):
    """Pure-JAX reference for verification."""
    h = x
    for w, b in params:
        h = jnp.tanh(h @ w + b)
    return h


if __name__ == "__main__":
    # Small shapes consistent with the module: Encoder(input_size=32,
    # code_size=16, hidden_sizes=[64, 48]); batch = 16.
    input_size, code_size, hidden_sizes = 32, 16, [64, 48]
    batch = 16

    key = jax.random.PRNGKey(0)
    key, kx = jax.random.split(key)
    x = jax.random.normal(kx, (batch, input_size), jnp.float32)

    params = init_encoder_params(key, input_size, code_size, hidden_sizes)

    out = encoder_forward(x, params)
    out = jax.block_until_ready(out)

    ref = encoder_forward_ref(x, params)
    assert out.shape == (batch, code_size)
    assert jnp.allclose(out, ref, atol=1e-5, rtol=1e-5)

    print("KERNEL_OK")
</pallas_src>

<mosaic_0001>
module attributes {stable_mosaic.version = 11 : i64} {
  func.func @kernel(%arg0: i32, %arg1: memref<8x32xf32, #tpu.memory_space<vmem>>, %arg2: memref<32x128xf32, #tpu.memory_space<vmem>>, %arg3: memref<128x128xf32, #tpu.memory_space<vmem>>, %arg4: memref<128x128xf32, #tpu.memory_space<vmem>>, %arg5: memref<1x384xf32, #tpu.memory_space<vmem>>, %arg6: memref<8x128xf32, #tpu.memory_space<vmem>>) attributes {dimension_semantics = [#tpu.dimension_semantics<parallel>], iteration_bounds = array<i64: 2>, scalar_prefetch = 0 : i64, scratch_operands = 0 : i64, tpu.core_type = #tpu.core_type<tc>, window_params = [{transform_indices = @transform_0, window_bounds = array<i64: 8, 32>}, {pipeline_mode = #tpu.pipeline_mode<synchronous>, transform_indices = @transform_1, window_bounds = array<i64: 32, 128>}, {pipeline_mode = #tpu.pipeline_mode<synchronous>, transform_indices = @transform_2, window_bounds = array<i64: 128, 128>}, {pipeline_mode = #tpu.pipeline_mode<synchronous>, transform_indices = @transform_3, window_bounds = array<i64: 128, 128>}, {pipeline_mode = #tpu.pipeline_mode<synchronous>, transform_indices = @transform_4, window_bounds = array<i64: 1, 384>}, {transform_indices = @transform_5, window_bounds = array<i64: 8, 128>}]} {
    %c0 = arith.constant 0 : index
    %c0_0 = arith.constant 0 : index
    %0 = vector.load %arg1[%c0, %c0_0] : memref<8x32xf32, #tpu.memory_space<vmem>>, vector<8x32xf32>
    %c0_1 = arith.constant 0 : index
    %c0_2 = arith.constant 0 : index
    %1 = vector.load %arg2[%c0_1, %c0_2] : memref<32x128xf32, #tpu.memory_space<vmem>>, vector<32x128xf32>
    %c0_3 = arith.constant 0 : index
    %c0_4 = arith.constant 0 : index
    %2 = vector.load %arg5[%c0_3, %c0_4] : memref<1x384xf32, #tpu.memory_space<vmem>>, vector<1x128xf32>
    %cst = arith.constant dense<0.000000e+00> : vector<8x128xf32>
    %3 = tpu.matmul %0, %1, %cst {dimension_numbers = #tpu.dot_dimension_numbers<[1], [0], [0], [1], [0, 0, 1, 1], [], []>} : vector<8x32xf32>, vector<32x128xf32>, vector<8x128xf32> -> vector<8x128xf32>
    %4 = vector.broadcast %2 : vector<1x128xf32> to vector<8x128xf32>
    %5 = arith.addf %3, %4 : vector<8x128xf32>
    %6 = math.tanh %5 : vector<8x128xf32>
    %c0_5 = arith.constant 0 : index
    %c0_6 = arith.constant 0 : index
    %7 = vector.load %arg3[%c0_5, %c0_6] : memref<128x128xf32, #tpu.memory_space<vmem>>, vector<128x128xf32>
    %c0_7 = arith.constant 0 : index
    %c128 = arith.constant 128 : index
    %8 = vector.load %arg5[%c0_7, %c128] : memref<1x384xf32, #tpu.memory_space<vmem>>, vector<1x128xf32>
    %cst_8 = arith.constant dense<0.000000e+00> : vector<8x128xf32>
    %9 = tpu.matmul %6, %7, %cst_8 {dimension_numbers = #tpu.dot_dimension_numbers<[1], [0], [0], [1], [0, 0, 1, 1], [], []>} : vector<8x128xf32>, vector<128x128xf32>, vector<8x128xf32> -> vector<8x128xf32>
    %10 = vector.broadcast %8 : vector<1x128xf32> to vector<8x128xf32>
    %11 = arith.addf %9, %10 : vector<8x128xf32>
    %12 = math.tanh %11 : vector<8x128xf32>
    %c0_9 = arith.constant 0 : index
    %c0_10 = arith.constant 0 : index
    %13 = vector.load %arg4[%c0_9, %c0_10] : memref<128x128xf32, #tpu.memory_space<vmem>>, vector<128x128xf32>
    %c0_11 = arith.constant 0 : index
    %c256 = arith.constant 256 : index
    %14 = vector.load %arg5[%c0_11, %c256] : memref<1x384xf32, #tpu.memory_space<vmem>>, vector<1x128xf32>
    %cst_12 = arith.constant dense<0.000000e+00> : vector<8x128xf32>
    %15 = tpu.matmul %12, %13, %cst_12 {dimension_numbers = #tpu.dot_dimension_numbers<[1], [0], [0], [1], [0, 0, 1, 1], [], []>} : vector<8x128xf32>, vector<128x128xf32>, vector<8x128xf32> -> vector<8x128xf32>
    %16 = vector.broadcast %14 : vector<1x128xf32> to vector<8x128xf32>
    %17 = arith.addf %15, %16 : vector<8x128xf32>
    %18 = math.tanh %17 : vector<8x128xf32>
    %c0_13 = arith.constant 0 : index
    %c0_14 = arith.constant 0 : index
    %19 = vector.load %arg6[%c0_13, %c0_14] : memref<8x128xf32, #tpu.memory_space<vmem>>, vector<8x128xf32>
    tpu.vector_store %arg6[%c0_13, %c0_14], %18 {strides = array<i32>} : memref<8x128xf32, #tpu.memory_space<vmem>>, vector<8x128xf32>,
    return
  }
  func.func @transform_0(%arg0: i32) -> (i32, i32) {
    %c0_i32 = arith.constant 0 : i32
    %c0_i32_0 = arith.constant 0 : i32
    return %arg0, %c0_i32 : i32, i32
  }
  func.func @transform_1(%arg0: i32) -> (i32, i32) {
    %c0_i32 = arith.constant 0 : i32
    %c0_i32_0 = arith.constant 0 : i32
    %c0_i32_1 = arith.constant 0 : i32
    return %c0_i32, %c0_i32_0 : i32, i32
  }
  func.func @transform_2(%arg0: i32) -> (i32, i32) {
    %c0_i32 = arith.constant 0 : i32
    %c0_i32_0 = arith.constant 0 : i32
    %c0_i32_1 = arith.constant 0 : i32
    return %c0_i32, %c0_i32_0 : i32, i32
  }
  func.func @transform_3(%arg0: i32) -> (i32, i32) {
    %c0_i32 = arith.constant 0 : i32
    %c0_i32_0 = arith.constant 0 : i32
    %c0_i32_1 = arith.constant 0 : i32
    return %c0_i32, %c0_i32_0 : i32, i32
  }
  func.func @transform_4(%arg0: i32) -> (i32, i32) {
    %c0_i32 = arith.constant 0 : i32
    %c0_i32_0 = arith.constant 0 : i32
    %c0_i32_1 = arith.constant 0 : i32
    return %c0_i32, %c0_i32_0 : i32, i32
  }
  func.func @transform_5(%arg0: i32) -> (i32, i32) {
    %c0_i32 = arith.constant 0 : i32
    %c0_i32_0 = arith.constant 0 : i32
    return %arg0, %c0_i32 : i32, i32
  }
}

</mosaic_0001>

<llo_original>
// kernel: tpu_custom_call.1
$region0: #{tpu_custom_call.1}
  #allocation0 [shape = 'u32[]', space=smem, size = 0x4, offset = 0x4, fixed_abs, tag = 'smem constant byte address 0x4 - core index']
  #allocation1 [shape = 'u32[144,128]{1,0:T(1,128)}', space=vmem, size = 0x12000, scoped, tag = 'internal scratch']
  %s0 = inlined_call_operand.hbm [shape: f32[16,32], index: 0, kind: input, shape index: {}]
  %s1 = inlined_call_operand.hbm [shape: f32[32,128], index: 1, kind: input, shape index: {}]
  %s2 = inlined_call_operand.hbm [shape: f32[128,128], index: 2, kind: input, shape index: {}]
  %s3 = inlined_call_operand.hbm [shape: f32[128,128], index: 3, kind: input, shape index: {}]
  %s4 = inlined_call_operand.vmem [shape: f32[1,384], index: 4, kind: input, shape index: {}]
  %s5 = inlined_call_operand.hbm [shape: f32[16,128], index: 5, kind: output, shape index: {}]
  %s6 = sld [smem:[#allocation0]]
  $region69: #{tpu_custom_call.1} parent=0
    _
  %s8 = ssub.s32 1, %s6
  %s9 = scalar_select 0, %s8, %s6
  $region1: #{tpu_custom_call.1} parent=0
    #allocation2 [shape = 'u8[8192]{0}', space=vmem, size = 0x2000, scoped, tag = 'input window, operand 0']
    #allocation3 [shape = 's32[2]{0}', space=sflag, size = 0x8, scoped, tag = 'scoped memory for tpu_custom_call.1']
    #allocation4 [shape = 's32[2]{0}', space=sflag, size = 0x8, scoped, tag = 'scoped memory for tpu_custom_call.1']
    #allocation5 [shape = 'u8[16384]{0}', space=vmem, size = 0x4000, scoped, tag = 'input window, operand 1, single buffered']
    #allocation6 [shape = 's32[1]{0}', space=sflag, size = 0x4, scoped, tag = 'scoped memory for tpu_custom_call.1']
    #allocation7 [shape = 'u8[65536]{0}', space=vmem, size = 0x10000, scoped, tag = 'input window, operand 2, single buffered']
    #allocation8 [shape = 'u8[65536]{0}', space=vmem, size = 0x10000, scoped, tag = 'input window, operand 3, single buffered']
    #allocation9 [shape = 's32[1]{0}', space=sflag, size = 0x4, scoped, tag = 'scoped memory for tpu_custom_call.1']
    #allocation10 [shape = 'u8[8192]{0}', space=vmem, size = 0x2000, scoped, tag = 'output window, operand 0']
    %10 = vsyncpa [#allocation3], 0
    %s11 = scalar_lea.sflag [#allocation3], 1
    %12 = vsyncpa %s11, 0
    %13 = vsyncpa [#allocation6], 0
    %14 = vsyncpa [#allocation9], 0
    %15 = vsyncpa [#allocation4], 0
    %s16 = scalar_lea.sflag [#allocation4], 1
    %17 = vsyncpa %s16, 0
    loop: start=0, step=1, limit=4
    $region2: #{tpu_custom_call.1} parent=1 // loop_pre_header
      _
    $region3: #{tpu_custom_call.1} parent=1 // loop_header
      %s19 = sphi 0, %s23
      %p20 = scmp.ge.s32.totalorder %s19, 4
      %s29 = sphi 0, %s31
      %s32 = sphi 0, %s29
      %s33 = sphi 0, %s32
      %s49 = sphi 0, %s33
      %s53 = sphi 0, %s53
      %s55 = sphi 0, %s53
      %s56 = sphi 0, %s55
      %s70 = sphi 0, %s56
      %s74 = sphi 0, %s74
      %s76 = sphi 0, %s74
      %s77 = sphi 0, %s76
      %s91 = sphi 0, %s77
      %s95 = sphi 0, %s95
      %s97 = sphi 0, %s95
      %s98 = sphi 0, %s97
      %s112 = sphi 0, %s98
      %s116 = sphi 0, %s116
      %s118 = sphi 0, %s116
      %s119 = sphi 0, %s118
      %s133 = sphi 0, %s119
      %s139 = sphi 0, %s141
      %s142 = sphi 0, %s139
      %s143 = sphi 0, %s142
      %s159 = sphi 0, %s143
    $region4: #{tpu_custom_call.1} parent=1 // loop_header_branch
      %22 = sbr.rel (%p20) target = $region8
    $region5: #{tpu_custom_call.1} parent=1 // loop_body
      %s24 = ssub.s32 %s19, 1
      %s25 = ssub.s32 %s19, 2
      %s26 = sadd.s32 %s19, 1
      %s27 = ssub.s32 %s19, %s26
      %p28 = scmp.eq.s32.totalorder %s27, 0
      %s30 = sadd.s32 %s29, 1
      %s31 = scalar_select %p28, %s29, %s30
      %p34 = pneg %p28
      %p35 = scmp.eq.s32.totalorder %s19, 1
      %p36 = por %p34, %p35
      %p37 = scmp.ne.s32.totalorder %s29, %s32
      %p38 = scmp.eq.s32.totalorder %s19, 0
      %p39 = por %p37, %p38
      %p40 = scmp.ne.s32.totalorder %s29, %s32
      %p41 = scmp.eq.s32.totalorder %s24, 1
      %p42 = por %p40, %p41
      %p43 = scmp.ne.s32.totalorder %s32, %s33
      %p44 = scmp.eq.s32.totalorder %s24, 0
      %p45 = por %p43, %p44
      %p46 = scmp.ne.s32.totalorder %s32, %s33
      %p47 = scmp.eq.s32.totalorder %s25, 1
      %p48 = por %p46, %p47
      %p50 = scmp.ne.s32.totalorder %s33, %s49
      %p51 = scmp.eq.s32.totalorder %s25, 0
      %p52 = por %p50, %p51
      %s54 = sadd.s32 %s53, 1
      %p57 = scmp.eq.s32.totalorder %s19, 1
      %p58 = scmp.ne.s32.totalorder %s53, %s55
      %p59 = scmp.eq.s32.totalorder %s19, 0
      %p60 = por %p58, %p59
      %p61 = scmp.ne.s32.totalorder %s53, %s55
      %p62 = scmp.eq.s32.totalorder %s24, 1
      %p63 = por %p61, %p62
      %p64 = scmp.ne.s32.totalorder %s55, %s56
      %p65 = scmp.eq.s32.totalorder %s24, 0
      %p66 = por %p64, %p65
      %p67 = scmp.ne.s32.totalorder %s55, %s56
      %p68 = scmp.eq.s32.totalorder %s25, 1
      %p69 = por %p67, %p68
      %p71 = scmp.ne.s32.totalorder %s56, %s70
      %p72 = scmp.eq.s32.totalorder %s25, 0
      %p73 = por %p71, %p72
      %s75 = sadd.s32 %s74, 1
      %p78 = scmp.eq.s32.totalorder %s19, 1
      %p79 = scmp.ne.s32.totalorder %s74, %s76
      %p80 = scmp.eq.s32.totalorder %s19, 0
      %p81 = por %p79, %p80
      %p82 = scmp.ne.s32.totalorder %s74, %s76
      %p83 = scmp.eq.s32.totalorder %s24, 1
      %p84 = por %p82, %p83
      %p85 = scmp.ne.s32.totalorder %s76, %s77
      %p86 = scmp.eq.s32.totalorder %s24, 0
      %p87 = por %p85, %p86
      %p88 = scmp.ne.s32.totalorder %s76, %s77
      %p89 = scmp.eq.s32.totalorder %s25, 1
      %p90 = por %p88, %p89
      %p92 = scmp.ne.s32.totalorder %s77, %s91
      %p93 = scmp.eq.s32.totalorder %s25, 0
      %p94 = por %p92, %p93
      %s96 = sadd.s32 %s95, 1
      %p99 = scmp.eq.s32.totalorder %s19, 1
      %p100 = scmp.ne.s32.totalorder %s95, %s97
      %p101 = scmp.eq.s32.totalorder %s19, 0
      %p102 = por %p100, %p101
      %p103 = scmp.ne.s32.totalorder %s95, %s97
      %p104 = scmp.eq.s32.totalorder %s24, 1
      %p105 = por %p103, %p104
      %p106 = scmp.ne.s32.totalorder %s97, %s98
      %p107 = scmp.eq.s32.totalorder %s24, 0
      %p108 = por %p106, %p107
      %p109 = scmp.ne.s32.totalorder %s97, %s98
      %p110 = scmp.eq.s32.totalorder %s25, 1
      %p111 = por %p109, %p110
      %p113 = scmp.ne.s32.totalorder %s98, %s112
      %p114 = scmp.eq.s32.totalorder %s25, 0
      %p115 = por %p113, %p114
      %s117 = sadd.s32 %s116, 1
      %p120 = scmp.eq.s32.totalorder %s19, 1
      %p121 = scmp.ne.s32.totalorder %s116, %s118
      %p122 = scmp.eq.s32.totalorder %s19, 0
      %p123 = por %p121, %p122
      %p124 = scmp.ne.s32.totalorder %s116, %s118
      %p125 = scmp.eq.s32.totalorder %s24, 1
      %p126 = por %p124, %p125
      %p127 = scmp.ne.s32.totalorder %s118, %s119
      %p128 = scmp.eq.s32.totalorder %s24, 0
      %p129 = por %p127, %p128
      %p130 = scmp.ne.s32.totalorder %s118, %s119
      %p131 = scmp.eq.s32.totalorder %s25, 1
      %p132 = por %p130, %p131
      %p134 = scmp.ne.s32.totalorder %s119, %s133
      %p135 = scmp.eq.s32.totalorder %s25, 0
      %p136 = por %p134, %p135
      %s137 = ssub.s32 %s19, %s26
      %p138 = scmp.eq.s32.totalorder %s137, 0
      %s140 = sadd.s32 %s139, 1
      %s141 = scalar_select %p138, %s139, %s140
      %p144 = pneg %p138
      %p145 = scmp.eq.s32.totalorder %s19, 1
      %p146 = por %p144, %p145
      %p147 = scmp.ne.s32.totalorder %s139, %s142
      %p148 = scmp.eq.s32.totalorder %s19, 0
      %p149 = por %p147, %p148
      %p150 = scmp.ne.s32.totalorder %s139, %s142
      %p151 = scmp.eq.s32.totalorder %s24, 1
      %p152 = por %p150, %p151
      %p153 = scmp.ne.s32.totalorder %s142, %s143
      %p154 = scmp.eq.s32.totalorder %s24, 0
      %p155 = por %p153, %p154
      %p156 = scmp.ne.s32.totalorder %s142, %s143
      %p157 = scmp.eq.s32.totalorder %s25, 1
      %p158 = por %p156, %p157
      %p160 = scmp.ne.s32.totalorder %s143, %s159
      %p161 = scmp.eq.s32.totalorder %s25, 0
      %p162 = por %p160, %p161
      %p163 = scmp.le.s32.totalorder 1, %s19
      %p164 = scmp.lt.s32.totalorder %s19, 3
      %p165 = pnand %p163, %p164
      %p166 = pneg %p165
      // Predicated region
      $region9: #{tpu_custom_call.1} parent=5 // pred_check
        _
      $region10: #{tpu_custom_call.1} parent=5 // pred_check_branch
        %168 = sbr.rel (%p165) target = $region12
      $region11: #{tpu_custom_call.1} parent=5 // pred_region
        %s169 = ssub.s32 %s19, 1
        // Predicated region
        $region13: #{tpu_custom_call.1} parent=11 // pred_check
          %p170 = pneg %p66
        $region14: #{tpu_custom_call.1} parent=11 // pred_check_branch
          %172 = sbr.rel (%p170) target = $region16
        $region15: #{tpu_custom_call.1} parent=11 // pred_region
          %s174 = ssub.s32 512, 512
          %175 = vsyncadd [#allocation6], %s174
          %s176 = sshll.u32 [#allocation5], 4
          %s177 = int_to_ptr.vmem [resolvable:$true] %s176
          %182 = dma.hbm_to_vmem [thread:$0]  %s1, 512, %s177, [#allocation6], 128, 128, 8
        $region16: #{tpu_custom_call.1} parent=11 // pred_fallthru
          _
        // Predicated region
        $region17: #{tpu_custom_call.1} parent=11 // pred_check
          %p183 = pneg %p87
        $region18: #{tpu_custom_call.1} parent=11 // pred_check_branch
          %185 = sbr.rel (%p183) target = $region20
        $region19: #{tpu_custom_call.1} parent=11 // pred_region
          %s187 = ssub.s32 2048, 2048
          %188 = vsyncadd [#allocation6], %s187
          %s189 = sshll.u32 [#allocation7], 4
          %s190 = int_to_ptr.vmem [resolvable:$true] %s189
          %195 = dma.hbm_to_vmem [thread:$0]  %s2, 2048, %s190, [#allocation6], 128, 128, 8
        $region20: #{tpu_custom_call.1} parent=11 // pred_fallthru
          _
        // Predicated region
        $region21: #{tpu_custom_call.1} parent=11 // pred_check
          %p196 = pneg %p108
        $region22: #{tpu_custom_call.1} parent=11 // pred_check_branch
          %198 = sbr.rel (%p196) target = $region24
        $region23: #{tpu_custom_call.1} parent=11 // pred_region
          %s200 = ssub.s32 2048, 2048
          %201 = vsyncadd [#allocation9], %s200
          %s202 = sshll.u32 [#allocation8], 4
          %s203 = int_to_ptr.vmem [resolvable:$true] %s202
          %208 = dma.hbm_to_vmem [thread:$0]  %s3, 2048, %s203, [#allocation9], 128, 128, 8
        $region24: #{tpu_custom_call.1} parent=11 // pred_fallthru
          _
        // Predicated region
        $region25: #{tpu_custom_call.1} parent=11 // pred_check
          %p209 = pneg %p129
        $region26: #{tpu_custom_call.1} parent=11 // pred_check_branch
          %211 = sbr.rel (%p209) target = $region28
        $region27: #{tpu_custom_call.1} parent=11 // pred_region
          _
        $region28: #{tpu_custom_call.1} parent=11 // pred_fallthru
          _
      $region12: #{tpu_custom_call.1} parent=5 // pred_fallthru
        _
      %p212 = scmp.lt.s32.totalorder %s19, 2
      // Predicated region
      $region29: #{tpu_custom_call.1} parent=5 // pred_check
        %p213 = pneg %p212
      $region30: #{tpu_custom_call.1} parent=5 // pred_check_branch
        %215 = sbr.rel (%p213) target = $region32
      $region31: #{tpu_custom_call.1} parent=5 // pred_region
        // Predicated region
        $region33: #{tpu_custom_call.1} parent=31 // pred_check
          %p216 = pneg %p39
        $region34: #{tpu_custom_call.1} parent=31 // pred_check_branch
          %218 = sbr.rel (%p216) target = $region36
        $region35: #{tpu_custom_call.1} parent=31 // pred_region
          %s219 = sand.u32 %s29, 1
          %s220 = scalar_lea.sflag [#allocation3], %s219
          %s221 = sand.u32 %s29, 1
          %s222 = smul.addr %s221, 8
          %s223 = scalar_lea.vmem [#allocation2], %s222
          %s225 = ssub.s32 128, 128
          %226 = vsyncadd %s220, %s225
          %s227 = smul.addr %s19, 128
          %s228 = scalar_lea.hbm %s0, %s227
          %s230 = sshll.u32 %s223, 4
          %s231 = int_to_ptr.vmem [resolvable:$true] %s230
          %233 = dma.hbm_to_vmem [thread:$0]  %s228, 128, %s231, %s220
        $region36: #{tpu_custom_call.1} parent=31 // pred_fallthru
          _
      $region32: #{tpu_custom_call.1} parent=5 // pred_fallthru
        _
      %p234 = scmp.le.s32.totalorder 1, %s19
      %p235 = scmp.lt.s32.totalorder %s19, 3
      %p236 = pnand %p234, %p235
      %p237 = pneg %p236
      // Predicated region
      $region37: #{tpu_custom_call.1} parent=5 // pred_check
        _
      $region38: #{tpu_custom_call.1} parent=5 // pred_check_branch
        %239 = sbr.rel (%p236) target = $region40
      $region39: #{tpu_custom_call.1} parent=5 // pred_region
        %s240 = ssub.s32 %s19, 1
        %s241 = sand.u32 %s32, 1
        %s242 = scalar_lea.sflag [#allocation3], %s241
        %s243 = sand.u32 %s32, 1
        %s244 = smul.addr %s243, 8
        %s245 = scalar_lea.vmem [#allocation2], %s244
        // Predicated region
        $region41: #{tpu_custom_call.1} parent=39 // pred_check
          %p246 = pneg %p45
        $region42: #{tpu_custom_call.1} parent=39 // pred_check_branch
          %248 = sbr.rel (%p246) target = $region44
        $region43: #{tpu_custom_call.1} parent=39 // pred_region
          %249 = dma.done %s242, 128
        $region44: #{tpu_custom_call.1} parent=39 // pred_fallthru
          _
        // Predicated region
        $region45: #{tpu_custom_call.1} parent=39 // pred_check
          %p250 = pneg %p66
        $region46: #{tpu_custom_call.1} parent=39 // pred_check_branch
          %252 = sbr.rel (%p250) target = $region48
        $region47: #{tpu_custom_call.1} parent=39 // pred_region
          %253 = dma.done [#allocation6], 512
        $region48: #{tpu_custom_call.1} parent=39 // pred_fallthru
          _
        // Predicated region
        $region49: #{tpu_custom_call.1} parent=39 // pred_check
          %p254 = pneg %p87
        $region50: #{tpu_custom_call.1} parent=39 // pred_check_branch
          %256 = sbr.rel (%p254) target = $region52
        $region51: #{tpu_custom_call.1} parent=39 // pred_region
          %257 = dma.done [#allocation6], 2048
        $region52: #{tpu_custom_call.1} parent=39 // pred_fallthru
          _
        // Predicated region
        $region53: #{tpu_custom_call.1} parent=39 // pred_check
          %p258 = pneg %p108
        $region54: #{tpu_custom_call.1} parent=39 // pred_check_branch
          %260 = sbr.rel (%p258) target = $region56
        $region55: #{tpu_custom_call.1} parent=39 // pred_region
          %261 = dma.done [#allocation9], 2048
        $region56: #{tpu_custom_call.1} parent=39 // pred_fallthru
          _
        %s262 = sand.u32 %s32, 1
        %s263 = scalar_lea.sflag [#allocation3], %s262
        %s264 = sand.u32 %s32, 1
        %s265 = smul.addr %s264, 8
        %s266 = scalar_lea.vmem [#allocation2], %s265
        %p267 = pneg %p45
        %p268 = pneg %p42
        %p269 = pneg %p66
        %p270 = pneg %p63
        %p271 = pneg %p87
        %p272 = pneg %p84
        %p273 = pneg %p108
        %p274 = pneg %p105
        %p275 = pneg %p129
        %p276 = pneg %p126
        %p277 = pneg %p155
        %p278 = pneg %p152
        %s279 = sand.u32 %s142, 1
        %s280 = scalar_lea.sflag [#allocation4], %s279
        %s281 = sand.u32 %s142, 1
        %s282 = smul.addr %s281, 8
        %s283 = scalar_lea.vmem [#allocation10], %s282
        %v284 = vld [vmem:[%s245] sm:$0xff]
        %v285 = vld [vmem:[#allocation5] sm:$0xff]
        %v286 = vld [vmem:[#allocation5 + $0x8] sm:$0xff]
        %v287 = vld [vmem:[#allocation5 + $0x10] sm:$0xff]
        %v288 = vld [vmem:[#allocation5 + $0x18] sm:$0xff]
        %v289 = vld [vmem:[%s4] sm:$0x1]
        %v291 = vlaneseq
        %v292 = vshrl.u32 %v291, 7
        %v293 = vsub.s32 0, %v292
        %v294 = vrot.slane %v289, %v293
        %vm296 = vcmask 261120
        %v298 = vsel %vm296, %v284, 0
        %300 = vmatprep.subr.mxu0 0.0
        %301 = vmatpush1.msra.mxu0 %v285
        %302 = vmatprep.subr.mxu0 0.0
        %303 = vmatpush1.msra.mxu0 %v286
        %304 = vmatprep.subr.mxu0 0.0
        %305 = vmatpush1.msra.mxu0 %v287
        %306 = vmatprep.subr.mxu0 0.0
        %307 = vmatpush1.msra.mxu0 %v288
        %308 = vmatprep.subr.mxu0 0.0
        %309 = vmatpush1.msra.mxu0 0.0
        %310 = vmatprep.subr.mxu0 0.0
        %311 = vmatpush1.msra.mxu0 0.0
        %312 = vmatprep.subr.mxu0 0.0
        %313 = vmatpush1.msra.mxu0 0.0
        %314 = vmatprep.subr.mxu0 0.0
        %315 = vmatpush1.msra.mxu0 0.0
        %316 = vmatprep.subr.mxu0 0.0
        %317 = vmatpush1.msra.mxu0 0.0
        %318 = vmatprep.subr.mxu0 0.0
        %319 = vmatpush1.msra.mxu0 0.0
        %320 = vmatprep.subr.mxu0 0.0
        %321 = vmatpush1.msra.mxu0 0.0
        %322 = vmatprep.subr.mxu0 0.0
        %323 = vmatpush1.msra.mxu0 0.0
        %324 = vmatprep.subr.mxu0 0.0
        %325 = vmatpush1.msra.mxu0 0.0
        %326 = vmatprep.subr.mxu0 0.0
        %327 = vmatpush1.msra.mxu0 0.0
        %328 = vmatprep.subr.mxu0 0.0
        %329 = vmatpush1.msra.mxu0 0.0
        %330 = vmatprep.subr.mxu0 0.0
        %331 = vmatpush1.msra.mxu0 0.0
        %332 = vmatprep.subr.mxu0 0.0
        %333 = vmatpush1.msra.mxu0 0.0
        %334 = vmatprep.subr.mxu0 0.0
        %335 = vmatpush1.msra.mxu0 0.0
        %336 = vmatprep.subr.mxu0 0.0
        %337 = vmatpush1.msra.mxu0 0.0
        %338 = vmatprep.subr.mxu0 0.0
        %339 = vmatpush1.msra.mxu0 0.0
        %340 = vmatprep.subr.mxu0 0.0
        %341 = vmatpush1.msra.mxu0 0.0
        %342 = vmatprep.subr.mxu0 0.0
        %343 = vmatpush1.msra.mxu0 0.0
        %344 = vmatprep.subr.mxu0 0.0
        %345 = vmatpush1.msra.mxu0 0.0
        %346 = vmatprep.subr.mxu0 0.0
        %347 = vmatpush1.msra.mxu0 0.0
        %348 = vmatprep.subr.mxu0 0.0
        %349 = vmatpush1.msra.mxu0 0.0
        %350 = vmatprep.subr.mxu0 0.0
        %351 = vmatpush1.msra.mxu0 0.0
        %352 = vmatprep.subr.mxu0 0.0
        %353 = vmatpush1.msra.mxu0 0.0
        %354 = vmatprep.subr.mxu0 0.0
        %355 = vmatpush1.msra.mxu0 0.0
        %356 = vmatprep.subr.mxu0 0.0
        %357 = vmatpush1.msra.mxu0 0.0
        %358 = vmatprep.subr.mxu0 0.0
        %359 = vmatpush1.msra.mxu0 0.0
        %360 = vmatprep.subr.mxu0 0.0
        %361 = vmatpush1.msra.mxu0 0.0
        %362 = vmatprep.subr.mxu0 0.0
        %363 = vmatpush1.msra.mxu0 0.0
        %364 = vmatprep.mubr.f32.mxu0 0.0
        %365 = vmatmul.mubr.f32.gmra.mrb[0].mxu0 %v298
        %v366 = vpop.f32.mrb[0].mxu0
        %v367 = vadd.f32 %v294, %v366
        %v368 = vpop.f32.mrb[0].mxu0
        %369 = vdwg.mxu0
        %v370 = vtanh.pop %v367
        %v371 = vld [vmem:[#allocation7] sm:$0xff]
        %v372 = vld [vmem:[#allocation7 + $0x8] sm:$0xff]
        %v373 = vld [vmem:[#allocation7 + $0x10] sm:$0xff]
        %v374 = vld [vmem:[#allocation7 + $0x18] sm:$0xff]
        %v375 = vld [vmem:[#allocation7 + $0x20] sm:$0xff]
        %v376 = vld [vmem:[#allocation7 + $0x28] sm:$0xff]
        %v377 = vld [vmem:[#allocation7 + $0x30] sm:$0xff]
        %v378 = vld [vmem:[#allocation7 + $0x38] sm:$0xff]
        %v379 = vld [vmem:[#allocation7 + $0x40] sm:$0xff]
        %v380 = vld [vmem:[#allocation7 + $0x48] sm:$0xff]
        %v381 = vld [vmem:[#allocation7 + $0x50] sm:$0xff]
        %v382 = vld [vmem:[#allocation7 + $0x58] sm:$0xff]
        %v383 = vld [vmem:[#allocation7 + $0x60] sm:$0xff]
        %v384 = vld [vmem:[#allocation7 + $0x68] sm:$0xff]
        %v385 = vld [vmem:[#allocation7 + $0x70] sm:$0xff]
        %v386 = vld [vmem:[#allocation7 + $0x78] sm:$0xff]
        %v387 = vld [vmem:[%s4 + $0x1] sm:$0x1]
        %v389 = vlaneseq
        %v390 = vshrl.u32 %v389, 7
        %v391 = vsub.s32 0, %v390
        %v392 = vrot.slane %v387, %v391
        %394 = vmatprep.subr.mxu0 0.0
        %395 = vmatpush1.msra.mxu0 %v371
        %396 = vmatprep.subr.mxu0 0.0
        %397 = vmatpush1.msra.mxu0 %v372
        %398 = vmatprep.subr.mxu0 0.0
        %399 = vmatpush1.msra.mxu0 %v373
        %400 = vmatprep.subr.mxu0 0.0
        %401 = vmatpush1.msra.mxu0 %v374
        %402 = vmatprep.subr.mxu0 0.0
        %403 = vmatpush1.msra.mxu0 %v375
        %404 = vmatprep.subr.mxu0 0.0
        %405 = vmatpush1.msra.mxu0 %v376
        %406 = vmatprep.subr.mxu0 0.0
        %407 = vmatpush1.msra.mxu0 %v377
        %408 = vmatprep.subr.mxu0 0.0
        %409 = vmatpush1.msra.mxu0 %v378
        %410 = vmatprep.subr.mxu0 0.0
        %411 = vmatpush1.msra.mxu0 %v379
        %412 = vmatprep.subr.mxu0 0.0
        %413 = vmatpush1.msra.mxu0 %v380
        %414 = vmatprep.subr.mxu0 0.0
        %415 = vmatpush1.msra.mxu0 %v381
        %416 = vmatprep.subr.mxu0 0.0
        %417 = vmatpush1.msra.mxu0 %v382
        %418 = vmatprep.subr.mxu0 0.0
        %419 = vmatpush1.msra.mxu0 %v383
        %420 = vmatprep.subr.mxu0 0.0
        %421 = vmatpush1.msra.mxu0 %v384
        %422 = vmatprep.subr.mxu0 0.0
        %423 = vmatpush1.msra.mxu0 %v385
        %424 = vmatprep.subr.mxu0 0.0
        %425 = vmatpush1.msra.mxu0 %v386
        %426 = vmatprep.subr.mxu0 0.0
        %427 = vmatpush1.msra.mxu0 0.0
        %428 = vmatprep.subr.mxu0 0.0
        %429 = vmatpush1.msra.mxu0 0.0
        %430 = vmatprep.subr.mxu0 0.0
        %431 = vmatpush1.msra.mxu0 0.0
        %432 = vmatprep.subr.mxu0 0.0
        %433 = vmatpush1.msra.mxu0 0.0
        %434 = vmatprep.subr.mxu0 0.0
        %435 = vmatpush1.msra.mxu0 0.0
        %436 = vmatprep.subr.mxu0 0.0
        %437 = vmatpush1.msra.mxu0 0.0
        %438 = vmatprep.subr.mxu0 0.0
        %439 = vmatpush1.msra.mxu0 0.0
        %440 = vmatprep.subr.mxu0 0.0
        %441 = vmatpush1.msra.mxu0 0.0
        %442 = vmatprep.subr.mxu0 0.0
        %443 = vmatpush1.msra.mxu0 0.0
        %444 = vmatprep.subr.mxu0 0.0
        %445 = vmatpush1.msra.mxu0 0.0
        %446 = vmatprep.subr.mxu0 0.0
        %447 = vmatpush1.msra.mxu0 0.0
        %448 = vmatprep.subr.mxu0 0.0
        %449 = vmatpush1.msra.mxu0 0.0
        %450 = vmatprep.subr.mxu0 0.0
        %451 = vmatpush1.msra.mxu0 0.0
        %452 = vmatprep.subr.mxu0 0.0
        %453 = vmatpush1.msra.mxu0 0.0
        %454 = vmatprep.subr.mxu0 0.0
        %455 = vmatpush1.msra.mxu0 0.0
        %456 = vmatprep.subr.mxu0 0.0
        %457 = vmatpush1.msra.mxu0 0.0
        %458 = vmatprep.mubr.f32.mxu0 0.0
        %459 = vmatmul.mubr.f32.gmra.mrb[0].mxu0 %v370
        %v460 = vpop.f32.mrb[0].mxu0
        %v461 = vadd.f32 %v392, %v460
        %v462 = vpop.f32.mrb[0].mxu0
        %463 = vdwg.mxu0
        %v464 = vtanh.pop %v461
        %v465 = vld [vmem:[#allocation8] sm:$0xff]
        %v466 = vld [vmem:[#allocation8 + $0x8] sm:$0xff]
        %v467 = vld [vmem:[#allocation8 + $0x10] sm:$0xff]
        %v468 = vld [vmem:[#allocation8 + $0x18] sm:$0xff]
        %v469 = vld [vmem:[#allocation8 + $0x20] sm:$0xff]
        %v470 = vld [vmem:[#allocation8 + $0x28] sm:$0xff]
        %v471 = vld [vmem:[#allocation8 + $0x30] sm:$0xff]
        %v472 = vld [vmem:[#allocation8 + $0x38] sm:$0xff]
        %v473 = vld [vmem:[#allocation8 + $0x40] sm:$0xff]
        %v474 = vld [vmem:[#allocation8 + $0x48] sm:$0xff]
        %v475 = vld [vmem:[#allocation8 + $0x50] sm:$0xff]
        %v476 = vld [vmem:[#allocation8 + $0x58] sm:$0xff]
        %v477 = vld [vmem:[#allocation8 + $0x60] sm:$0xff]
        %v478 = vld [vmem:[#allocation8 + $0x68] sm:$0xff]
        %v479 = vld [vmem:[#allocation8 + $0x70] sm:$0xff]
        %v480 = vld [vmem:[#allocation8 + $0x78] sm:$0xff]
        %v481 = vld [vmem:[%s4 + $0x2] sm:$0x1]
        %v483 = vlaneseq
        %v484 = vshrl.u32 %v483, 7
        %v485 = vsub.s32 0, %v484
        %v486 = vrot.slane %v481, %v485
        %488 = vmatprep.subr.mxu0 0.0
        %489 = vmatpush1.msra.mxu0 %v465
        %490 = vmatprep.subr.mxu0 0.0
        %491 = vmatpush1.msra.mxu0 %v466
        %492 = vmatprep.subr.mxu0 0.0
        %493 = vmatpush1.msra.mxu0 %v467
        %494 = vmatprep.subr.mxu0 0.0
        %495 = vmatpush1.msra.mxu0 %v468
        %496 = vmatprep.subr.mxu0 0.0
        %497 = vmatpush1.msra.mxu0 %v469
        %498 = vmatprep.subr.mxu0 0.0
        %499 = vmatpush1.msra.mxu0 %v470
        %500 = vmatprep.subr.mxu0 0.0
        %501 = vmatpush1.msra.mxu0 %v471
        %502 = vmatprep.subr.mxu0 0.0
        %503 = vmatpush1.msra.mxu0 %v472
        %504 = vmatprep.subr.mxu0 0.0
        %505 = vmatpush1.msra.mxu0 %v473
        %506 = vmatprep.subr.mxu0 0.0
        %507 = vmatpush1.msra.mxu0 %v474
        %508 = vmatprep.subr.mxu0 0.0
        %509 = vmatpush1.msra.mxu0 %v475
        %510 = vmatprep.subr.mxu0 0.0
        %511 = vmatpush1.msra.mxu0 %v476
        %512 = vmatprep.subr.mxu0 0.0
        %513 = vmatpush1.msra.mxu0 %v477
        %514 = vmatprep.subr.mxu0 0.0
        %515 = vmatpush1.msra.mxu0 %v478
        %516 = vmatprep.subr.mxu0 0.0
        %517 = vmatpush1.msra.mxu0 %v479
        %518 = vmatprep.subr.mxu0 0.0
        %519 = vmatpush1.msra.mxu0 %v480
        %520 = vmatprep.subr.mxu0 0.0
        %521 = vmatpush1.msra.mxu0 0.0
        %522 = vmatprep.subr.mxu0 0.0
        %523 = vmatpush1.msra.mxu0 0.0
        %524 = vmatprep.subr.mxu0 0.0
        %525 = vmatpush1.msra.mxu0 0.0
        %526 = vmatprep.subr.mxu0 0.0
        %527 = vmatpush1.msra.mxu0 0.0
        %528 = vmatprep.subr.mxu0 0.0
        %529 = vmatpush1.msra.mxu0 0.0
        %530 = vmatprep.subr.mxu0 0.0
        %531 = vmatpush1.msra.mxu0 0.0
        %532 = vmatprep.subr.mxu0 0.0
        %533 = vmatpush1.msra.mxu0 0.0
        %534 = vmatprep.subr.mxu0 0.0
        %535 = vmatpush1.msra.mxu0 0.0
        %536 = vmatprep.subr.mxu0 0.0
        %537 = vmatpush1.msra.mxu0 0.0
        %538 = vmatprep.subr.mxu0 0.0
        %539 = vmatpush1.msra.mxu0 0.0
        %540 = vmatprep.subr.mxu0 0.0
        %541 = vmatpush1.msra.mxu0 0.0
        %542 = vmatprep.subr.mxu0 0.0
        %543 = vmatpush1.msra.mxu0 0.0
        %544 = vmatprep.subr.mxu0 0.0
        %545 = vmatpush1.msra.mxu0 0.0
        %546 = vmatprep.subr.mxu0 0.0
        %547 = vmatpush1.msra.mxu0 0.0
        %548 = vmatprep.subr.mxu0 0.0
        %549 = vmatpush1.msra.mxu0 0.0
        %550 = vmatprep.subr.mxu0 0.0
        %551 = vmatpush1.msra.mxu0 0.0
        %552 = vmatprep.mubr.f32.mxu0 0.0
        %553 = vmatmul.mubr.f32.gmra.mrb[0].mxu0 %v464
        %v554 = vpop.f32.mrb[0].mxu0
        %v555 = vadd.f32 %v486, %v554
        %v556 = vpop.f32.mrb[0].mxu0
        %557 = vdwg.mxu0
        %v558 = vtanh.pop %v555
        %559 = vst [vmem:[%s283] sm:$0xff] %v558
        %s560 = sand.u32 %s142, 1
        %s561 = scalar_lea.sflag [#allocation4], %s560
        %s562 = sand.u32 %s142, 1
        %s563 = smul.addr %s562, 8
        %s564 = scalar_lea.vmem [#allocation10], %s563
        // Predicated region
        $region57: #{tpu_custom_call.1} parent=39 // pred_check
          %p565 = pneg %p152
        $region58: #{tpu_custom_call.1} parent=39 // pred_check_branch
          %567 = sbr.rel (%p565) target = $region60
        $region59: #{tpu_custom_call.1} parent=39 // pred_region
          %s569 = ssub.s32 128, 128
          %570 = vsyncadd %s561, %s569
          %s571 = smul.addr %s24, 128
          %s572 = scalar_lea.hbm %s5, %s571
          %s574 = sshll.u32 %s564, 4
          %s575 = int_to_ptr.vmem [resolvable:$true] %s574
          %577 = dma.vmem_to_hbm [thread:$0]  %s575, 128, %s572, %s561
        $region60: #{tpu_custom_call.1} parent=39 // pred_fallthru
          _
      $region40: #{tpu_custom_call.1} parent=5 // pred_fallthru
        _
      %p578 = scmp.le.s32.totalorder 2, %s19
      // Predicated region
      $region61: #{tpu_custom_call.1} parent=5 // pred_check
        %p579 = pneg %p578
      $region62: #{tpu_custom_call.1} parent=5 // pred_check_branch
        %581 = sbr.rel (%p579) target = $region64
      $region63: #{tpu_custom_call.1} parent=5 // pred_region
        %s582 = ssub.s32 %s19, 2
        // Predicated region
        $region65: #{tpu_custom_call.1} parent=63 // pred_check
          %p583 = pneg %p158
        $region66: #{tpu_custom_call.1} parent=63 // pred_check_branch
          %585 = sbr.rel (%p583) target = $region68
        $region67: #{tpu_custom_call.1} parent=63 // pred_region
          %s586 = sand.u32 %s143, 1
          %s587 = scalar_lea.sflag [#allocation4], %s586
          %s588 = sand.u32 %s143, 1
          %s589 = smul.addr %s588, 8
          %s590 = scalar_lea.vmem [#allocation10], %s589
          %591 = dma.done %s587, 128
        $region68: #{tpu_custom_call.1} parent=63 // pred_fallthru
          _
      $region64: #{tpu_custom_call.1} parent=5 // pred_fallthru
        _
    $region6: #{tpu_custom_call.1} parent=1 // loop_footer
      %s23 = sadd.s32 1, %s19
    $region7: #{tpu_custom_call.1} parent=1 // loop_footer_branch
      %18 = sbr.rel target = $region3
    $region8: #{tpu_custom_call.1} parent=1 // loop_exit
      _
    %592 = vsyncpa [#allocation3], 1
    %s593 = scalar_lea.sflag [#allocation3], 1
    %594 = vsyncpa %s593, 1
    %595 = vsyncpa [#allocation6], 1
    %596 = vsyncpa [#allocation9], 1
    %597 = vsyncpa [#allocation4], 1
    %s598 = scalar_lea.sflag [#allocation4], 1
    %599 = vsyncpa %s598, 1

</llo_original>
